<compile_context>
chip_gen: v7x
topology: tpu7x:2x2x1
jax: 0.10.0
libtpu: 0.0.40
codegen_flags: <defaults>
</compile_context>

<pallas_src>
import functools

import jax
import jax.numpy as jnp
from jax.experimental import pallas as pl
from jax.experimental.pallas import tpu as pltpu


def _round_up(x, m):
    return (x + m - 1) // m * m


def _choose_row_tile(n_patches, batch, target=512):
    """Rows per grid step over the flattened (B*N) patch-row axis.

    Returns (tile_rows, reps): tile_rows == reps * n_patches (whole images per
    tile) when N <= target, else reps == 1 and tile_rows divides n_patches.
    Prefers ~`target` rows per step (keeps the mem-bound pipeline near the HBM
    roofline) while keeping >= 2 grid steps when there is enough total work so
    v7x megacore can shard the "parallel" grid axis across both TensorCores.
    """
    total = batch * n_patches
    if n_patches <= target:
        divs = [c for c in range(1, batch + 1) if batch % c == 0]
        c = max([x for x in divs if x * n_patches <= target] or [1])
        # Prefer >= 2 grid steps (megacore) when there is enough work.
        while c > 1 and total // (c * n_patches) < 2:
            c = max(x for x in divs if x < c)
        if (c == 1 and batch == 1 and n_patches % 2 == 0
                and (n_patches // 2) % 8 == 0 and n_patches // 2 >= 128):
            return n_patches // 2, 1      # split a single image across cores
        return c * n_patches, c
    # Within-image tiling: largest multiple-of-8 divisor of N <= target.
    start = target - target % 8
    for t in range(start, 7, -8):
        if n_patches % t == 0:
            return t, 1
    # TODO(synk): N with no multiple-of-8 divisor (e.g. 729) falls back to a
    # full-image tile; still fits VMEM with bf16 blocks but is not split.
    return n_patches, 1


def _siglip_embed_ln_kernel(patches_ref, w_ref, pos_ref, gamma_ref, beta_ref,
                            out_ref, *, eps, inv_d, d, reps):
    # patches_ref: (TR, K_pad)      bf16 patch rows (flattened (b, n) axis)
    # w_ref:       (K_pad, D_pad)   bf16 flattened conv weight
    # pos_ref:     (N|TR, D_pad)    bf16 position embedding + folded conv bias
    # gamma_ref:   (1, D_pad)       f32  post-LayerNorm weight (0 in pad lanes)
    # beta_ref:    (1, D_pad)       f32  post-LayerNorm bias   (0 in pad lanes)
    # out_ref:     (TR, D)          bf16 true embedding width (no padding)
    x = patches_ref[...]
    # Patch embedding == Conv2d(kernel=stride=patch) as one MXU matmul,
    # bf16 operands with f32 accumulation.
    h = jnp.dot(x, w_ref[...], preferred_element_type=jnp.float32)
    pos = pos_ref[...].astype(jnp.float32)
    if reps > 1:                           # tile covers `reps` whole images
        pos = jnp.concatenate([pos] * reps, axis=0)
    h = h + pos                            # pos emb + conv bias (pad lanes 0)

    # Post-LayerNorm over the true embedding dim D.  Padded lanes of h are
    # exactly zero, so sums over D_pad lanes divided by the true D are exact.
    # Two-pass variance for stability; re-zero the centered pad lanes first.
    mean = jnp.sum(h, axis=-1, keepdims=True) * inv_d
    xc = h - mean
    d_pad = h.shape[-1]
    if d != d_pad:
        lane = jax.lax.broadcasted_iota(jnp.int32, h.shape, 1)
        xc = jnp.where(lane < d, xc, 0.0)
    var = jnp.sum(xc * xc, axis=-1, keepdims=True) * inv_d
    normed = xc * jax.lax.rsqrt(var + eps)
    out = normed * gamma_ref[...] + beta_ref[...]
    if d != d_pad:
        out = out[:, :d]                   # drop pad lanes before the store
    out_ref[...] = out.astype(out_ref.dtype)


def siglip_vision_model(pixel_values, params, *, patch_size, eps,
                        compute_dtype=jnp.bfloat16, out_dtype=jnp.bfloat16):
    """pixel_values: [B, C, H, W] float32 (NCHW, like PyTorch).

    Returns [B, N, D] embeddings in out_dtype, N = (H//P) * (W//P).
    """
    B, C, H, W = pixel_values.shape
    P = patch_size
    Hp, Wp = H // P, W // P
    N = Hp * Wp
    R = B * N
    conv_w = params["conv_w"]          # [D, C, P, P]  (PyTorch Conv2d layout)
    conv_b = params["conv_b"]          # [D]
    pos_emb = params["pos_emb"]        # [N, D]
    ln_w = params["ln_w"]              # [D]
    ln_b = params["ln_b"]              # [D]
    D = conv_w.shape[0]
    K = C * P * P
    K_pad = _round_up(K, 128)          # lane-dense contraction dim
    D_pad = _round_up(D, 128)          # lane-dense matmul output dim

    # im2col: [B, C, Hp, P, Wp, P] -> [B, Hp, Wp, C, P, P] -> [B*N, K].
    # TODO(synk): this rearrangement is a separate XLA pass over the pixel
    # tensor; an in-kernel strip-DMA reading NCHW directly would remove one
    # HBM round trip of the patch matrix but needs a 6-D in-kernel relayout
    # that Mosaic does not lower reliably today.
    patches = pixel_values.reshape(B, C, Hp, P, Wp, P)
    patches = patches.transpose(0, 2, 4, 1, 3, 5).reshape(R, K)
    patches = patches.astype(compute_dtype)
    if K_pad != K:
        patches = jnp.pad(patches, ((0, 0), (0, K_pad - K)))

    # Flatten conv weight to [K, D] with matching (c, kh, kw) feature order,
    # cast to bf16, zero-pad to [K_pad, D_pad].
    w_flat = conv_w.reshape(D, K).T.astype(compute_dtype)
    w_flat = jnp.pad(w_flat, ((0, K_pad - K), (0, D_pad - D)))

    # Fold the conv bias into the position-embedding table (removes one
    # operand and a full-tile add per step); store it in bf16 so the per-step
    # pos read costs half the bytes (LayerNorm math stays f32 in-kernel).
    pos_bias = (pos_emb + conv_b[None, :]).astype(compute_dtype)
    pos_bias = jnp.pad(pos_bias, ((0, 0), (0, D_pad - D)))

    gamma = jnp.pad(ln_w.astype(jnp.float32), (0, D_pad - D)).reshape(1, D_pad)
    beta = jnp.pad(ln_b.astype(jnp.float32), (0, D_pad - D)).reshape(1, D_pad)

    TR, reps = _choose_row_tile(N, B)
    num_tiles = R // TR
    whole_images = (TR % N == 0)
    if whole_images:
        pos_spec = pl.BlockSpec((N, D_pad), lambda m: (0, 0))
        kern_reps = TR // N
    else:
        n_tiles_per_img = N // TR
        pos_spec = pl.BlockSpec((TR, D_pad), lambda m: (m % n_tiles_per_img, 0))
        kern_reps = 1

    kernel = functools.partial(_siglip_embed_ln_kernel, eps=float(eps),
                               inv_d=1.0 / float(D), d=D, reps=kern_reps)

    out = pl.pallas_call(
        kernel,
        out_shape=jax.ShapeDtypeStruct((R, D), out_dtype),
        grid_spec=pltpu.PrefetchScalarGridSpec(
            num_scalar_prefetch=0,
            grid=(num_tiles,),
            in_specs=[
                pl.BlockSpec((TR, K_pad), lambda m: (m, 0)),      # patches
                pl.BlockSpec((K_pad, D_pad), lambda m: (0, 0)),   # conv weight
                pos_spec,                                         # pos + bias
                pl.BlockSpec((1, D_pad), lambda m: (0, 0)),       # ln gamma
                pl.BlockSpec((1, D_pad), lambda m: (0, 0)),       # ln beta
            ],
            out_specs=pl.BlockSpec((TR, D), lambda m: (m, 0)),
        ),
        compiler_params=pltpu.CompilerParams(
            dimension_semantics=("parallel",),
        ),
    )(patches, w_flat, pos_bias, gamma, beta)

    return out.reshape(B, N, D)


def make_params(key, *, hidden_size, nb_channels, patch_size, nb_positions):
    D, C, P, N = hidden_size, nb_channels, patch_size, nb_positions
    k0, k1, k2 = jax.random.split(key, 3)
    return {
        "conv_w": 0.02 * jax.random.normal(k0, (D, C, P, P), jnp.float32),
        "conv_b": 0.01 * jax.random.normal(k1, (D,), jnp.float32),
        "pos_emb": 0.02 * jax.random.normal(k2, (N, D), jnp.float32),
        # nn.LayerNorm default init: weight=1, bias=0
        "ln_w": jnp.ones((D,), jnp.float32),
        "ln_b": jnp.zeros((D,), jnp.float32),
    }


def reference_jax(pixel_values, params, *, patch_size, eps,
                  compute_dtype=jnp.bfloat16):
    """Pure-JAX reference of the same forward (emulating the bf16 casts)."""
    B, C, H, W = pixel_values.shape
    P = patch_size
    Hp, Wp = H // P, W // P
    N = Hp * Wp
    D = params["conv_w"].shape[0]
    K = C * P * P
    patches = pixel_values.reshape(B, C, Hp, P, Wp, P)
    patches = patches.transpose(0, 2, 4, 1, 3, 5).reshape(B, N, K)
    patches = patches.astype(compute_dtype).astype(jnp.float32)
    w = params["conv_w"].reshape(D, K).T.astype(compute_dtype).astype(jnp.float32)
    pos = (params["pos_emb"] + params["conv_b"][None, :]).astype(
        compute_dtype).astype(jnp.float32)
    h = patches @ w + pos[None]
    mean = h.mean(-1, keepdims=True)
    var = ((h - mean) ** 2).mean(-1, keepdims=True)
    return (h - mean) * jax.lax.rsqrt(var + eps) * params["ln_w"] + params["ln_b"]


if __name__ == "__main__":
    EPS = 1e-9                 # SiglipVisionConfig default layer_norm_eps
    key = jax.random.PRNGKey(0)

    def run_case(B, C, IMG, P, D, case_key):
        N = (IMG // P) ** 2
        kx, kp = jax.random.split(case_key)
        pixel_values = jax.random.normal(kx, (B, C, IMG, IMG), jnp.float32)
        params = make_params(kp, hidden_size=D, nb_channels=C,
                             patch_size=P, nb_positions=N)
        out = siglip_vision_model(pixel_values, params, patch_size=P, eps=EPS)
        out = jax.block_until_ready(out)
        ref = reference_jax(pixel_values, params, patch_size=P, eps=EPS)
        assert out.shape == (B, N, D), out.shape
        assert jnp.allclose(out.astype(jnp.float32), ref,
                            atol=3e-2, rtol=3e-2), "mismatch vs reference"

    k1, k2, k3 = jax.random.split(key, 3)
    # Small configs consistent with the module (image 16, patch 4 -> 16 patches).
    run_case(B=2, C=3, IMG=16, P=4, D=32, case_key=k1)    # D needs lane padding
    run_case(B=2, C=3, IMG=16, P=4, D=128, case_key=k2)   # lane-aligned D path
    run_case(B=4, C=3, IMG=16, P=4, D=128, case_key=k3)   # multi-image tiles
    print("KERNEL_OK")
</pallas_src>

<mosaic_0001>
module attributes {stable_mosaic.version = 11 : i64} {
  func.func @_siglip_embed_ln_kernel(%arg0: i32, %arg1: memref<16x128xbf16, #tpu.memory_space<vmem>>, %arg2: memref<128x128xbf16, #tpu.memory_space<vmem>>, %arg3: memref<16x128xbf16, #tpu.memory_space<vmem>>, %arg4: memref<1x128xf32, #tpu.memory_space<vmem>>, %arg5: memref<1x128xf32, #tpu.memory_space<vmem>>, %arg6: memref<16x32xbf16, #tpu.memory_space<vmem>>) attributes {dimension_semantics = [#tpu.dimension_semantics<parallel>], iteration_bounds = array<i64: 2>, scalar_prefetch = 0 : i64, scratch_operands = 0 : i64, tpu.core_type = #tpu.core_type<tc>, window_params = [{transform_indices = @transform_0, window_bounds = array<i64: 16, 128>}, {pipeline_mode = #tpu.pipeline_mode<synchronous>, transform_indices = @transform_1, window_bounds = array<i64: 128, 128>}, {pipeline_mode = #tpu.pipeline_mode<synchronous>, transform_indices = @transform_2, window_bounds = array<i64: 16, 128>}, {pipeline_mode = #tpu.pipeline_mode<synchronous>, transform_indices = @transform_3, window_bounds = array<i64: 1, 128>}, {pipeline_mode = #tpu.pipeline_mode<synchronous>, transform_indices = @transform_4, window_bounds = array<i64: 1, 128>}, {transform_indices = @transform_5, window_bounds = array<i64: 16, 32>}]} {
    %c0 = arith.constant 0 : index
    %c0_0 = arith.constant 0 : index
    %0 = vector.load %arg1[%c0, %c0_0] : memref<16x128xbf16, #tpu.memory_space<vmem>>, vector<16x128xbf16>
    %c0_1 = arith.constant 0 : index
    %c0_2 = arith.constant 0 : index
    %1 = vector.load %arg2[%c0_1, %c0_2] : memref<128x128xbf16, #tpu.memory_space<vmem>>, vector<128x128xbf16>
    %cst = arith.constant dense<0.000000e+00> : vector<16x128xf32>
    %2 = tpu.matmul %0, %1, %cst {dimension_numbers = #tpu.dot_dimension_numbers<[1], [0], [0], [1], [0, 0, 1, 1], [], []>} : vector<16x128xbf16>, vector<128x128xbf16>, vector<16x128xf32> -> vector<16x128xf32>
    %c0_3 = arith.constant 0 : index
    %c0_4 = arith.constant 0 : index
    %3 = vector.load %arg3[%c0_3, %c0_4] : memref<16x128xbf16, #tpu.memory_space<vmem>>, vector<16x128xbf16>
    %4 = arith.extf %3 : vector<16x128xbf16> to vector<16x128xf32>
    %5 = arith.addf %2, %4 : vector<16x128xf32>
    %cst_5 = arith.constant dense<0.000000e+00> : vector<16xf32>
    %6 = vector.multi_reduction <add>, %5, %cst_5 [1] : vector<16x128xf32> to vector<16xf32>
    %7 = vector.shape_cast %6 : vector<16xf32> to vector<16x1xf32>
    %cst_6 = arith.constant 3.125000e-02 : f32
    %8 = vector.broadcast %cst_6 : f32 to vector<16x1xf32>
    %9 = arith.mulf %7, %8 : vector<16x1xf32>
    %10 = vector.broadcast %9 : vector<16x1xf32> to vector<16x128xf32>
    %11 = arith.subf %5, %10 : vector<16x128xf32>
    %12 = tpu.iota {dimensions = array<i32: 1>} : vector<16x128xi32>
    %c32_i32 = arith.constant 32 : i32
    %13 = vector.broadcast %c32_i32 : i32 to vector<16x128xi32>
    %14 = arith.cmpi slt, %12, %13 : vector<16x128xi32>
    %cst_7 = arith.constant 0.000000e+00 : f32
    %15 = vector.broadcast %cst_7 : f32 to vector<16x128xf32>
    %16 = arith.select %14, %11, %15 : vector<16x128xi1>, vector<16x128xf32>
    %17 = arith.mulf %16, %16 : vector<16x128xf32>
    %cst_8 = arith.constant dense<0.000000e+00> : vector<16xf32>
    %18 = vector.multi_reduction <add>, %17, %cst_8 [1] : vector<16x128xf32> to vector<16xf32>
    %19 = vector.shape_cast %18 : vector<16xf32> to vector<16x1xf32>
    %cst_9 = arith.constant 3.125000e-02 : f32
    %20 = vector.broadcast %cst_9 : f32 to vector<16x1xf32>
    %21 = arith.mulf %19, %20 : vector<16x1xf32>
    %cst_10 = arith.constant 9.99999971E-10 : f32
    %22 = vector.broadcast %cst_10 : f32 to vector<16x1xf32>
    %23 = arith.addf %21, %22 : vector<16x1xf32>
    %24 = math.rsqrt %23 : vector<16x1xf32>
    %25 = vector.broadcast %24 : vector<16x1xf32> to vector<16x128xf32>
    %26 = arith.mulf %16, %25 : vector<16x128xf32>
    %c0_11 = arith.constant 0 : index
    %c0_12 = arith.constant 0 : index
    %27 = vector.load %arg4[%c0_11, %c0_12] : memref<1x128xf32, #tpu.memory_space<vmem>>, vector<1x128xf32>
    %28 = vector.broadcast %27 : vector<1x128xf32> to vector<16x128xf32>
    %29 = arith.mulf %26, %28 : vector<16x128xf32>
    %c0_13 = arith.constant 0 : index
    %c0_14 = arith.constant 0 : index
    %30 = vector.load %arg5[%c0_13, %c0_14] : memref<1x128xf32, #tpu.memory_space<vmem>>, vector<1x128xf32>
    %31 = vector.broadcast %30 : vector<1x128xf32> to vector<16x128xf32>
    %32 = arith.addf %29, %31 : vector<16x128xf32>
    %33 = vector.extract_strided_slice %32 {offsets = [0, 0], sizes = [16, 32], strides = [1, 1]} : vector<16x128xf32> to vector<16x32xf32>
    %34 = arith.truncf %33 : vector<16x32xf32> to vector<16x32xbf16>
    %c0_15 = arith.constant 0 : index
    %c0_16 = arith.constant 0 : index
    %35 = vector.load %arg6[%c0_15, %c0_16] : memref<16x32xbf16, #tpu.memory_space<vmem>>, vector<16x32xbf16>
    tpu.vector_store %arg6[%c0_15, %c0_16], %34 {strides = array<i32>} : memref<16x32xbf16, #tpu.memory_space<vmem>>, vector<16x32xbf16>,
    return
  }
  func.func @transform_0(%arg0: i32) -> (i32, i32) {
    %c0_i32 = arith.constant 0 : i32
    %c0_i32_0 = arith.constant 0 : i32
    return %arg0, %c0_i32 : i32, i32
  }
  func.func @transform_1(%arg0: i32) -> (i32, i32) {
    %c0_i32 = arith.constant 0 : i32
    %c0_i32_0 = arith.constant 0 : i32
    %c0_i32_1 = arith.constant 0 : i32
    return %c0_i32, %c0_i32_0 : i32, i32
  }
  func.func @transform_2(%arg0: i32) -> (i32, i32) {
    %c0_i32 = arith.constant 0 : i32
    %c0_i32_0 = arith.constant 0 : i32
    %c0_i32_1 = arith.constant 0 : i32
    return %c0_i32, %c0_i32_0 : i32, i32
  }
  func.func @transform_3(%arg0: i32) -> (i32, i32) {
    %c0_i32 = arith.constant 0 : i32
    %c0_i32_0 = arith.constant 0 : i32
    %c0_i32_1 = arith.constant 0 : i32
    return %c0_i32, %c0_i32_0 : i32, i32
  }
  func.func @transform_4(%arg0: i32) -> (i32, i32) {
    %c0_i32 = arith.constant 0 : i32
    %c0_i32_0 = arith.constant 0 : i32
    %c0_i32_1 = arith.constant 0 : i32
    return %c0_i32, %c0_i32_0 : i32, i32
  }
  func.func @transform_5(%arg0: i32) -> (i32, i32) {
    %c0_i32 = arith.constant 0 : i32
    %c0_i32_0 = arith.constant 0 : i32
    return %arg0, %c0_i32 : i32, i32
  }
}

</mosaic_0001>

<llo_original>
// kernel: tpu_custom_call.1
$region0: #{tpu_custom_call.1}
  #allocation0 [shape = 'u32[]', space=smem, size = 0x4, offset = 0x4, fixed_abs, tag = 'smem constant byte address 0x4 - core index']
  #allocation1 [shape = 'u32[144,128]{1,0:T(1,128)}', space=vmem, size = 0x12000, scoped, tag = 'internal scratch']
  %s0 = inlined_call_operand.hbm [shape: bf16[32,128], index: 0, kind: input, shape index: {}]
  %s1 = inlined_call_operand.hbm [shape: bf16[128,128], index: 1, kind: input, shape index: {}]
  %s2 = inlined_call_operand.hbm [shape: bf16[16,128], index: 2, kind: input, shape index: {}]
  %s3 = inlined_call_operand.vmem [shape: f32[1,128], index: 3, kind: input, shape index: {}]
  %s4 = inlined_call_operand.vmem [shape: f32[1,128], index: 4, kind: input, shape index: {}]
  %s5 = inlined_call_operand.hbm [shape: bf16[32,32], index: 5, kind: output, shape index: {}]
  %s6 = sld [smem:[#allocation0]]
  $region65: #{tpu_custom_call.1} parent=0
    _
  %s8 = ssub.s32 1, %s6
  %s9 = scalar_select 0, %s8, %s6
  $region1: #{tpu_custom_call.1} parent=0
    #allocation2 [shape = 'u8[8192]{0}', space=vmem, size = 0x2000, scoped, tag = 'input window, operand 0']
    #allocation3 [shape = 's32[2]{0}', space=sflag, size = 0x8, scoped, tag = 'scoped memory for tpu_custom_call.1']
    #allocation4 [shape = 's32[2]{0}', space=sflag, size = 0x8, scoped, tag = 'scoped memory for tpu_custom_call.1']
    #allocation5 [shape = 'u8[32768]{0}', space=vmem, size = 0x8000, scoped, tag = 'input window, operand 1, single buffered']
    #allocation6 [shape = 's32[1]{0}', space=sflag, size = 0x4, scoped, tag = 'scoped memory for tpu_custom_call.1']
    #allocation7 [shape = 'u8[4096]{0}', space=vmem, size = 0x1000, scoped, tag = 'input window, operand 2, single buffered']
    #allocation8 [shape = 'u8[8192]{0}', space=vmem, size = 0x2000, scoped, tag = 'output window, operand 0']
    %10 = vsyncpa [#allocation3], 0
    %s11 = scalar_lea.sflag [#allocation3], 1
    %12 = vsyncpa %s11, 0
    %13 = vsyncpa [#allocation6], 0
    %14 = vsyncpa [#allocation4], 0
    %s15 = scalar_lea.sflag [#allocation4], 1
    %16 = vsyncpa %s15, 0
    loop: start=0, step=1, limit=4
    $region2: #{tpu_custom_call.1} parent=1 // loop_pre_header
      _
    $region3: #{tpu_custom_call.1} parent=1 // loop_header
      %s18 = sphi 0, %s22
      %p19 = scmp.ge.s32.totalorder %s18, 4
      %s28 = sphi 0, %s30
      %s31 = sphi 0, %s28
      %s32 = sphi 0, %s31
      %s48 = sphi 0, %s32
      %s52 = sphi 0, %s52
      %s54 = sphi 0, %s52
      %s55 = sphi 0, %s54
      %s69 = sphi 0, %s55
      %s73 = sphi 0, %s73
      %s75 = sphi 0, %s73
      %s76 = sphi 0, %s75
      %s90 = sphi 0, %s76
      %s94 = sphi 0, %s94
      %s96 = sphi 0, %s94
      %s97 = sphi 0, %s96
      %s111 = sphi 0, %s97
      %s115 = sphi 0, %s115
      %s117 = sphi 0, %s115
      %s118 = sphi 0, %s117
      %s132 = sphi 0, %s118
      %s138 = sphi 0, %s140
      %s141 = sphi 0, %s138
      %s142 = sphi 0, %s141
      %s158 = sphi 0, %s142
    $region4: #{tpu_custom_call.1} parent=1 // loop_header_branch
      %21 = sbr.rel (%p19) target = $region8
    $region5: #{tpu_custom_call.1} parent=1 // loop_body
      %s23 = ssub.s32 %s18, 1
      %s24 = ssub.s32 %s18, 2
      %s25 = sadd.s32 %s18, 1
      %s26 = ssub.s32 %s18, %s25
      %p27 = scmp.eq.s32.totalorder %s26, 0
      %s29 = sadd.s32 %s28, 1
      %s30 = scalar_select %p27, %s28, %s29
      %p33 = pneg %p27
      %p34 = scmp.eq.s32.totalorder %s18, 1
      %p35 = por %p33, %p34
      %p36 = scmp.ne.s32.totalorder %s28, %s31
      %p37 = scmp.eq.s32.totalorder %s18, 0
      %p38 = por %p36, %p37
      %p39 = scmp.ne.s32.totalorder %s28, %s31
      %p40 = scmp.eq.s32.totalorder %s23, 1
      %p41 = por %p39, %p40
      %p42 = scmp.ne.s32.totalorder %s31, %s32
      %p43 = scmp.eq.s32.totalorder %s23, 0
      %p44 = por %p42, %p43
      %p45 = scmp.ne.s32.totalorder %s31, %s32
      %p46 = scmp.eq.s32.totalorder %s24, 1
      %p47 = por %p45, %p46
      %p49 = scmp.ne.s32.totalorder %s32, %s48
      %p50 = scmp.eq.s32.totalorder %s24, 0
      %p51 = por %p49, %p50
      %s53 = sadd.s32 %s52, 1
      %p56 = scmp.eq.s32.totalorder %s18, 1
      %p57 = scmp.ne.s32.totalorder %s52, %s54
      %p58 = scmp.eq.s32.totalorder %s18, 0
      %p59 = por %p57, %p58
      %p60 = scmp.ne.s32.totalorder %s52, %s54
      %p61 = scmp.eq.s32.totalorder %s23, 1
      %p62 = por %p60, %p61
      %p63 = scmp.ne.s32.totalorder %s54, %s55
      %p64 = scmp.eq.s32.totalorder %s23, 0
      %p65 = por %p63, %p64
      %p66 = scmp.ne.s32.totalorder %s54, %s55
      %p67 = scmp.eq.s32.totalorder %s24, 1
      %p68 = por %p66, %p67
      %p70 = scmp.ne.s32.totalorder %s55, %s69
      %p71 = scmp.eq.s32.totalorder %s24, 0
      %p72 = por %p70, %p71
      %s74 = sadd.s32 %s73, 1
      %p77 = scmp.eq.s32.totalorder %s18, 1
      %p78 = scmp.ne.s32.totalorder %s73, %s75
      %p79 = scmp.eq.s32.totalorder %s18, 0
      %p80 = por %p78, %p79
      %p81 = scmp.ne.s32.totalorder %s73, %s75
      %p82 = scmp.eq.s32.totalorder %s23, 1
      %p83 = por %p81, %p82
      %p84 = scmp.ne.s32.totalorder %s75, %s76
      %p85 = scmp.eq.s32.totalorder %s23, 0
      %p86 = por %p84, %p85
      %p87 = scmp.ne.s32.totalorder %s75, %s76
      %p88 = scmp.eq.s32.totalorder %s24, 1
      %p89 = por %p87, %p88
      %p91 = scmp.ne.s32.totalorder %s76, %s90
      %p92 = scmp.eq.s32.totalorder %s24, 0
      %p93 = por %p91, %p92
      %s95 = sadd.s32 %s94, 1
      %p98 = scmp.eq.s32.totalorder %s18, 1
      %p99 = scmp.ne.s32.totalorder %s94, %s96
      %p100 = scmp.eq.s32.totalorder %s18, 0
      %p101 = por %p99, %p100
      %p102 = scmp.ne.s32.totalorder %s94, %s96
      %p103 = scmp.eq.s32.totalorder %s23, 1
      %p104 = por %p102, %p103
      %p105 = scmp.ne.s32.totalorder %s96, %s97
      %p106 = scmp.eq.s32.totalorder %s23, 0
      %p107 = por %p105, %p106
      %p108 = scmp.ne.s32.totalorder %s96, %s97
      %p109 = scmp.eq.s32.totalorder %s24, 1
      %p110 = por %p108, %p109
      %p112 = scmp.ne.s32.totalorder %s97, %s111
      %p113 = scmp.eq.s32.totalorder %s24, 0
      %p114 = por %p112, %p113
      %s116 = sadd.s32 %s115, 1
      %p119 = scmp.eq.s32.totalorder %s18, 1
      %p120 = scmp.ne.s32.totalorder %s115, %s117
      %p121 = scmp.eq.s32.totalorder %s18, 0
      %p122 = por %p120, %p121
      %p123 = scmp.ne.s32.totalorder %s115, %s117
      %p124 = scmp.eq.s32.totalorder %s23, 1
      %p125 = por %p123, %p124
      %p126 = scmp.ne.s32.totalorder %s117, %s118
      %p127 = scmp.eq.s32.totalorder %s23, 0
      %p128 = por %p126, %p127
      %p129 = scmp.ne.s32.totalorder %s117, %s118
      %p130 = scmp.eq.s32.totalorder %s24, 1
      %p131 = por %p129, %p130
      %p133 = scmp.ne.s32.totalorder %s118, %s132
      %p134 = scmp.eq.s32.totalorder %s24, 0
      %p135 = por %p133, %p134
      %s136 = ssub.s32 %s18, %s25
      %p137 = scmp.eq.s32.totalorder %s136, 0
      %s139 = sadd.s32 %s138, 1
      %s140 = scalar_select %p137, %s138, %s139
      %p143 = pneg %p137
      %p144 = scmp.eq.s32.totalorder %s18, 1
      %p145 = por %p143, %p144
      %p146 = scmp.ne.s32.totalorder %s138, %s141
      %p147 = scmp.eq.s32.totalorder %s18, 0
      %p148 = por %p146, %p147
      %p149 = scmp.ne.s32.totalorder %s138, %s141
      %p150 = scmp.eq.s32.totalorder %s23, 1
      %p151 = por %p149, %p150
      %p152 = scmp.ne.s32.totalorder %s141, %s142
      %p153 = scmp.eq.s32.totalorder %s23, 0
      %p154 = por %p152, %p153
      %p155 = scmp.ne.s32.totalorder %s141, %s142
      %p156 = scmp.eq.s32.totalorder %s24, 1
      %p157 = por %p155, %p156
      %p159 = scmp.ne.s32.totalorder %s142, %s158
      %p160 = scmp.eq.s32.totalorder %s24, 0
      %p161 = por %p159, %p160
      %p162 = scmp.le.s32.totalorder 1, %s18
      %p163 = scmp.lt.s32.totalorder %s18, 3
      %p164 = pnand %p162, %p163
      %p165 = pneg %p164
      // Predicated region
      $region9: #{tpu_custom_call.1} parent=5 // pred_check
        _
      $region10: #{tpu_custom_call.1} parent=5 // pred_check_branch
        %167 = sbr.rel (%p164) target = $region12
      $region11: #{tpu_custom_call.1} parent=5 // pred_region
        %s168 = ssub.s32 %s18, 1
        // Predicated region
        $region13: #{tpu_custom_call.1} parent=11 // pred_check
          %p169 = pneg %p65
        $region14: #{tpu_custom_call.1} parent=11 // pred_check_branch
          %171 = sbr.rel (%p169) target = $region16
        $region15: #{tpu_custom_call.1} parent=11 // pred_region
          %s173 = ssub.s32 1024, 1024
          %174 = vsyncadd [#allocation6], %s173
          %s175 = sshll.u32 [#allocation5], 4
          %s176 = int_to_ptr.vmem [resolvable:$true] %s175
          %181 = dma.hbm_to_vmem [thread:$0]  %s1, 1024, %s176, [#allocation6], 64, 64, 4
        $region16: #{tpu_custom_call.1} parent=11 // pred_fallthru
          _
        // Predicated region
        $region17: #{tpu_custom_call.1} parent=11 // pred_check
          %p182 = pneg %p86
        $region18: #{tpu_custom_call.1} parent=11 // pred_check_branch
          %184 = sbr.rel (%p182) target = $region20
        $region19: #{tpu_custom_call.1} parent=11 // pred_region
          %s186 = ssub.s32 128, 128
          %187 = vsyncadd [#allocation6], %s186
          %s188 = sshll.u32 [#allocation7], 4
          %s189 = int_to_ptr.vmem [resolvable:$true] %s188
          %194 = dma.hbm_to_vmem [thread:$0]  %s2, 128, %s189, [#allocation6], 64, 64, 4
        $region20: #{tpu_custom_call.1} parent=11 // pred_fallthru
          _
        // Predicated region
        $region21: #{tpu_custom_call.1} parent=11 // pred_check
          %p195 = pneg %p107
        $region22: #{tpu_custom_call.1} parent=11 // pred_check_branch
          %197 = sbr.rel (%p195) target = $region24
        $region23: #{tpu_custom_call.1} parent=11 // pred_region
          _
        $region24: #{tpu_custom_call.1} parent=11 // pred_fallthru
          _
        // Predicated region
        $region25: #{tpu_custom_call.1} parent=11 // pred_check
          %p198 = pneg %p128
        $region26: #{tpu_custom_call.1} parent=11 // pred_check_branch
          %200 = sbr.rel (%p198) target = $region28
        $region27: #{tpu_custom_call.1} parent=11 // pred_region
          _
        $region28: #{tpu_custom_call.1} parent=11 // pred_fallthru
          _
      $region12: #{tpu_custom_call.1} parent=5 // pred_fallthru
        _
      %p201 = scmp.lt.s32.totalorder %s18, 2
      // Predicated region
      $region29: #{tpu_custom_call.1} parent=5 // pred_check
        %p202 = pneg %p201
      $region30: #{tpu_custom_call.1} parent=5 // pred_check_branch
        %204 = sbr.rel (%p202) target = $region32
      $region31: #{tpu_custom_call.1} parent=5 // pred_region
        // Predicated region
        $region33: #{tpu_custom_call.1} parent=31 // pred_check
          %p205 = pneg %p38
        $region34: #{tpu_custom_call.1} parent=31 // pred_check_branch
          %207 = sbr.rel (%p205) target = $region36
        $region35: #{tpu_custom_call.1} parent=31 // pred_region
          %s208 = sand.u32 %s28, 1
          %s209 = scalar_lea.sflag [#allocation3], %s208
          %s210 = sand.u32 %s28, 1
          %s211 = smul.addr %s210, 8
          %s212 = scalar_lea.vmem [#allocation2], %s211
          %s213 = smul.u32 2, %s18
          %s215 = ssub.s32 128, 128
          %216 = vsyncadd %s209, %s215
          %s217 = smul.addr %s213, 64
          %s218 = scalar_lea.hbm %s0, %s217
          %s219 = sshll.u32 %s212, 4
          %s220 = int_to_ptr.vmem [resolvable:$true] %s219
          %225 = dma.hbm_to_vmem [thread:$0]  %s218, 128, %s220, %s209, 64, 64, 4
        $region36: #{tpu_custom_call.1} parent=31 // pred_fallthru
          _
      $region32: #{tpu_custom_call.1} parent=5 // pred_fallthru
        _
      %p226 = scmp.le.s32.totalorder 1, %s18
      %p227 = scmp.lt.s32.totalorder %s18, 3
      %p228 = pnand %p226, %p227
      %p229 = pneg %p228
      // Predicated region
      $region37: #{tpu_custom_call.1} parent=5 // pred_check
        _
      $region38: #{tpu_custom_call.1} parent=5 // pred_check_branch
        %231 = sbr.rel (%p228) target = $region40
      $region39: #{tpu_custom_call.1} parent=5 // pred_region
        %s232 = ssub.s32 %s18, 1
        %s233 = sand.u32 %s31, 1
        %s234 = scalar_lea.sflag [#allocation3], %s233
        %s235 = sand.u32 %s31, 1
        %s236 = smul.addr %s235, 8
        %s237 = scalar_lea.vmem [#allocation2], %s236
        // Predicated region
        $region41: #{tpu_custom_call.1} parent=39 // pred_check
          %p238 = pneg %p44
        $region42: #{tpu_custom_call.1} parent=39 // pred_check_branch
          %240 = sbr.rel (%p238) target = $region44
        $region43: #{tpu_custom_call.1} parent=39 // pred_region
          %241 = dma.done %s234, 128
        $region44: #{tpu_custom_call.1} parent=39 // pred_fallthru
          _
        // Predicated region
        $region45: #{tpu_custom_call.1} parent=39 // pred_check
          %p242 = pneg %p65
        $region46: #{tpu_custom_call.1} parent=39 // pred_check_branch
          %244 = sbr.rel (%p242) target = $region48
        $region47: #{tpu_custom_call.1} parent=39 // pred_region
          %245 = dma.done [#allocation6], 1024
        $region48: #{tpu_custom_call.1} parent=39 // pred_fallthru
          _
        // Predicated region
        $region49: #{tpu_custom_call.1} parent=39 // pred_check
          %p246 = pneg %p86
        $region50: #{tpu_custom_call.1} parent=39 // pred_check_branch
          %248 = sbr.rel (%p246) target = $region52
        $region51: #{tpu_custom_call.1} parent=39 // pred_region
          %249 = dma.done [#allocation6], 128
        $region52: #{tpu_custom_call.1} parent=39 // pred_fallthru
          _
        %s250 = sand.u32 %s31, 1
        %s251 = scalar_lea.sflag [#allocation3], %s250
        %s252 = sand.u32 %s31, 1
        %s253 = smul.addr %s252, 8
        %s254 = scalar_lea.vmem [#allocation2], %s253
        %p255 = pneg %p44
        %p256 = pneg %p41
        %p257 = pneg %p65
        %p258 = pneg %p62
        %p259 = pneg %p86
        %p260 = pneg %p83
        %p261 = pneg %p107
        %p262 = pneg %p104
        %p263 = pneg %p128
        %p264 = pneg %p125
        %p265 = pneg %p154
        %p266 = pneg %p151
        %s267 = sand.u32 %s141, 1
        %s268 = scalar_lea.sflag [#allocation4], %s267
        %s269 = sand.u32 %s141, 1
        %s270 = smul.addr %s269, 8
        %s271 = scalar_lea.vmem [#allocation8], %s270
        %s272 = smul.u32 2, %s23
        %s273 = smul.u32 2, %s23
        %v275 = vld [vmem:[%s237] sm:$0xf]
        %v276 = vld [vmem:[%s237 + $0x4] sm:$0xf]
        %v277 = vld [vmem:[#allocation5] sm:$0xf]
        %v278 = vld [vmem:[#allocation5 + $0x4] sm:$0xf]
        %v279 = vld [vmem:[#allocation5 + $0x8] sm:$0xf]
        %v280 = vld [vmem:[#allocation5 + $0xc] sm:$0xf]
        %v281 = vld [vmem:[#allocation5 + $0x10] sm:$0xf]
        %v282 = vld [vmem:[#allocation5 + $0x14] sm:$0xf]
        %v283 = vld [vmem:[#allocation5 + $0x18] sm:$0xf]
        %v284 = vld [vmem:[#allocation5 + $0x1c] sm:$0xf]
        %v285 = vld [vmem:[#allocation5 + $0x20] sm:$0xf]
        %v286 = vld [vmem:[#allocation5 + $0x24] sm:$0xf]
        %v287 = vld [vmem:[#allocation5 + $0x28] sm:$0xf]
        %v288 = vld [vmem:[#allocation5 + $0x2c] sm:$0xf]
        %v289 = vld [vmem:[#allocation5 + $0x30] sm:$0xf]
        %v290 = vld [vmem:[#allocation5 + $0x34] sm:$0xf]
        %v291 = vld [vmem:[#allocation5 + $0x38] sm:$0xf]
        %v292 = vld [vmem:[#allocation5 + $0x3c] sm:$0xf]
        %v293 = vld [vmem:[#allocation7] sm:$0xf]
        %v294 = vld [vmem:[#allocation7 + $0x4] sm:$0xf]
        %v295 = vunpack.c.l.bf16 %v293
        %v296 = vunpack.c.l.bf16 %v294
        %v299 = vunpack.c.l.b16 %v275
        %v300 = vunpack.c.l.b16 %v276
        %v301 = vpack.c.b16 %v300, %v299
        %v319 = vunpack.c.l.b16 %v277
        %v320 = vunpack.c.l.b16 %v278
        %v321 = vunpack.c.l.b16 %v279
        %v322 = vunpack.c.l.b16 %v280
        %v323 = vunpack.c.l.b16 %v281
        %v324 = vunpack.c.l.b16 %v282
        %v325 = vunpack.c.l.b16 %v283
        %v326 = vunpack.c.l.b16 %v284
        %v327 = vunpack.c.l.b16 %v285
        %v328 = vunpack.c.l.b16 %v286
        %v329 = vunpack.c.l.b16 %v287
        %v330 = vunpack.c.l.b16 %v288
        %v331 = vunpack.c.l.b16 %v289
        %v332 = vunpack.c.l.b16 %v290
        %v333 = vunpack.c.l.b16 %v291
        %v334 = vunpack.c.l.b16 %v292
        %v335 = vpack.c.b16 %v320, %v319
        %v336 = vpack.c.b16 %v322, %v321
        %v337 = vpack.c.b16 %v324, %v323
        %v338 = vpack.c.b16 %v326, %v325
        %v339 = vpack.c.b16 %v328, %v327
        %v340 = vpack.c.b16 %v330, %v329
        %v341 = vpack.c.b16 %v332, %v331
        %v342 = vpack.c.b16 %v334, %v333
        %351 = vmatprep.subr.bf16.mxu0 0
        %352 = vmatpush1.bf16.msra.mxu0 %v335
        %353 = vmatprep.subr.bf16.mxu0 0
        %354 = vmatpush1.bf16.msra.mxu0 %v336
        %355 = vmatprep.subr.bf16.mxu0 0
        %356 = vmatpush1.bf16.msra.mxu0 %v337
        %357 = vmatprep.subr.bf16.mxu0 0
        %358 = vmatpush1.bf16.msra.mxu0 %v338
        %359 = vmatprep.subr.bf16.mxu0 0
        %360 = vmatpush1.bf16.msra.mxu0 %v339
        %361 = vmatprep.subr.bf16.mxu0 0
        %362 = vmatpush1.bf16.msra.mxu0 %v340
        %363 = vmatprep.subr.bf16.mxu0 0
        %364 = vmatpush1.bf16.msra.mxu0 %v341
        %365 = vmatprep.subr.bf16.mxu0 0
        %366 = vmatpush1.bf16.msra.mxu0 %v342
        %367 = vmatprep.subr.bf16.mxu0 0
        %368 = vmatpush1.bf16.msra.mxu0 0
        %369 = vmatprep.subr.bf16.mxu0 0
        %370 = vmatpush1.bf16.msra.mxu0 0
        %371 = vmatprep.subr.bf16.mxu0 0
        %372 = vmatpush1.bf16.msra.mxu0 0
        %373 = vmatprep.subr.bf16.mxu0 0
        %374 = vmatpush1.bf16.msra.mxu0 0
        %375 = vmatprep.subr.bf16.mxu0 0
        %376 = vmatpush1.bf16.msra.mxu0 0
        %377 = vmatprep.subr.bf16.mxu0 0
        %378 = vmatpush1.bf16.msra.mxu0 0
        %379 = vmatprep.subr.bf16.mxu0 0
        %380 = vmatpush1.bf16.msra.mxu0 0
        %381 = vmatprep.subr.bf16.mxu0 0
        %382 = vmatpush1.bf16.msra.mxu0 0
        %383 = vmatprep.mubr.bf16.mxu0 0
        %384 = vmatmul.mubr.bf16.gmra.mrb[0].mxu0 %v301
        %v385 = vpop.f32.mrb[0].mxu0
        %v386 = vadd.f32 %v295, %v385
        %v387 = vpop.f32.mrb[0].mxu0
        %v388 = vpop.f32.mrb[0].mxu0
        %v389 = vadd.f32 %v296, %v388
        %v390 = vpop.f32.mrb[0].mxu0
        %391 = vdwg.mxu0
        %392 = vadd.xlane.f32.xlu0 %v386
        %v393 = vpop.xlane.xlu0 %392
        %394 = vadd.xlane.f32.xlu0 %v389
        %v395 = vpop.xlane.xlu0 %394
        %v396 = vmul.f32 %v393, 0.03125
        %v397 = vmul.f32 %v395, 0.03125
        %v398 = vsub.f32 %v386, %v396
        %v399 = vsub.f32 %v389, %v397
        %v400 = vlaneseq
        %v401 = vand.u32 %v400, 127
        %vm402 = vcmp.lt.s32.totalorder %v401, 32
        %v403 = vsel %vm402, %v398, 0.0
        %v404 = vsel %vm402, %v399, 0.0
        %v405 = vmul.f32 %v403, %v403
        %v406 = vmul.f32 %v404, %v404
        %407 = vadd.xlane.f32.xlu0 %v405
        %v408 = vpop.xlane.xlu0 %407
        %409 = vadd.xlane.f32.xlu0 %v406
        %v410 = vpop.xlane.xlu0 %409
        %v411 = vmul.f32 %v408, 0.03125
        %v412 = vmul.f32 %v410, 0.03125
        %v413 = vadd.f32 %v411, 1e-09
        %v414 = vadd.f32 %v412, 1e-09
        %v415 = vrsqrt.pop %v413
        %v416 = vrsqrt.pop %v414
        %v417 = vmul.f32 %v403, %v415
        %v418 = vmul.f32 %v404, %v416
        %v419 = vld [vmem:[%s3] sm:$0x1]
        %v421 = vlaneseq
        %v422 = vshrl.u32 %v421, 7
        %v423 = vsub.s32 0, %v422
        %v424 = vrot.slane %v419, %v423
        %v426 = vmul.f32 %v417, %v424
        %v427 = vmul.f32 %v418, %v424
        %v428 = vld [vmem:[%s4] sm:$0x1]
        %v430 = vlaneseq
        %v431 = vshrl.u32 %v430, 7
        %v432 = vsub.s32 0, %v431
        %v433 = vrot.slane %v428, %v432
        %v435 = vadd.f32 %v426, %v433
        %v436 = vadd.f32 %v427, %v433
        %v437 = vpack.c.bf16 %v436, %v435
        %v439 = vunpack.c.l.b16 %v437
        %v440 = vunpack.c.h.b16 %v437
        %v441 = vpack.c.b16 %v439, %v439
        %v442 = vpack.c.b16 %v440, %v440
        %vm445 = vcmask 257024
        %446 = vst.msk [vmem:[%s271] sm:$0xf] %vm445, %v441
        %447 = vst.msk [vmem:[%s271 + $0x4] sm:$0xf] %vm445, %v442
        %s448 = sand.u32 %s141, 1
        %s449 = scalar_lea.sflag [#allocation4], %s448
        %s450 = sand.u32 %s141, 1
        %s451 = smul.addr %s450, 8
        %s452 = scalar_lea.vmem [#allocation8], %s451
        // Predicated region
        $region53: #{tpu_custom_call.1} parent=39 // pred_check
          %p453 = pneg %p151
        $region54: #{tpu_custom_call.1} parent=39 // pred_check_branch
          %455 = sbr.rel (%p453) target = $region56
        $region55: #{tpu_custom_call.1} parent=39 // pred_region
          %s456 = smul.u32 2, %s23
          %s458 = ssub.s32 128, 128
          %459 = vsyncadd %s449, %s458
          %s460 = smul.addr %s456, 64
          %s461 = scalar_lea.hbm %s5, %s460
          %s462 = sshll.u32 %s452, 4
          %s463 = int_to_ptr.vmem [resolvable:$true] %s462
          %468 = dma.vmem_to_hbm [thread:$0]  %s463, 128, %s461, %s449, 64, 64, 4
        $region56: #{tpu_custom_call.1} parent=39 // pred_fallthru
          _
      $region40: #{tpu_custom_call.1} parent=5 // pred_fallthru
        _
      %p469 = scmp.le.s32.totalorder 2, %s18
      // Predicated region
      $region57: #{tpu_custom_call.1} parent=5 // pred_check
        %p470 = pneg %p469
      $region58: #{tpu_custom_call.1} parent=5 // pred_check_branch
        %472 = sbr.rel (%p470) target = $region60
      $region59: #{tpu_custom_call.1} parent=5 // pred_region
        %s473 = ssub.s32 %s18, 2
        // Predicated region
        $region61: #{tpu_custom_call.1} parent=59 // pred_check
          %p474 = pneg %p157
        $region62: #{tpu_custom_call.1} parent=59 // pred_check_branch
          %476 = sbr.rel (%p474) target = $region64
        $region63: #{tpu_custom_call.1} parent=59 // pred_region
          %s477 = sand.u32 %s142, 1
          %s478 = scalar_lea.sflag [#allocation4], %s477
          %s479 = sand.u32 %s142, 1
          %s480 = smul.addr %s479, 8
          %s481 = scalar_lea.vmem [#allocation8], %s480
          %482 = dma.done %s478, 128
        $region64: #{tpu_custom_call.1} parent=59 // pred_fallthru
          _
      $region60: #{tpu_custom_call.1} parent=5 // pred_fallthru
        _
    $region6: #{tpu_custom_call.1} parent=1 // loop_footer
      %s22 = sadd.s32 1, %s18
    $region7: #{tpu_custom_call.1} parent=1 // loop_footer_branch
      %17 = sbr.rel target = $region3
    $region8: #{tpu_custom_call.1} parent=1 // loop_exit
      _
    %483 = vsyncpa [#allocation3], 1
    %s484 = scalar_lea.sflag [#allocation3], 1
    %485 = vsyncpa %s484, 1
    %486 = vsyncpa [#allocation6], 1
    %487 = vsyncpa [#allocation4], 1
    %s488 = scalar_lea.sflag [#allocation4], 1
    %489 = vsyncpa %s488, 1

</llo_original>
